<compile_context>
chip_gen: v5e
topology: v5e:2x2
jax: 0.10.0
libtpu: 0.0.40
codegen_flags: <defaults>
</compile_context>

<pallas_src>
import functools
import math

import jax
import jax.numpy as jnp
from jax import lax
from jax.experimental import pallas as pl
from jax.experimental.pallas import tpu as pltpu

C1_OUT = 8    # Conv1d(1 -> 8)
C2_OUT = 32   # Conv1d(8 -> 32)
KSIZE = 3     # kernel_size=3, padding=1

ROW_BLOCK_MAX = 4096           # rows per grid step (working set ~12 MiB at P=8)
VMEM_LIMIT_BYTES = 32 << 20    # safe on v5e/v6e (128 MiB phys) and v7x (64 MiB phys)


def _patch_embed_kernel(x_ref, w1_ref, b1_ref, w2_ref, b2_ref, pe_ref, o_ref):
    # x_ref : (rows, P)
    # w1_ref: (P, 8*P)        Toeplitz conv1 matrix (col = ci*P + p_out)
    # b1_ref: (1, 8*P)
    # w2_ref: (8*P, 32*P)     Toeplitz conv2 matrix (col = e*P + p_out)
    # b2_ref: (1, 32*P)
    # pe_ref: (rows, 32*P)    resident pe tile (row j -> patch index j % S)
    # o_ref : (rows, 32*P)
    x = x_ref[...]
    y1 = jnp.dot(x, w1_ref[...], preferred_element_type=jnp.float32) + b1_ref[...]
    y1 = jnp.maximum(y1, 0.0)
    y2 = jnp.dot(y1, w2_ref[...], preferred_element_type=jnp.float32) + b2_ref[...]
    y2 = jnp.maximum(y2, 0.0)
    o_ref[...] = y2 + pe_ref[...]


def _conv_toeplitz(w, patch_len):
    """torch Conv1d weight (O, I, K) with padding=K//2 -> dense matrix (I*P, O*P)
    such that W[i*P + p_in, o*P + p_out] = w[o, i, p_in - p_out + K//2] (0 outside taps)."""
    O, I, K = w.shape
    P = patch_len
    p = jnp.arange(P)
    kk = p[:, None] - p[None, :] + (K // 2)                 # (P_in, P_out) tap index
    valid = ((kk >= 0) & (kk < K)).astype(w.dtype)
    kk_c = jnp.clip(kk, 0, K - 1)
    w_t = jnp.transpose(w, (1, 0, 2))                       # (I, O, K)
    W = w_t[:, :, kk_c] * valid[None, None]                 # (I, O, P_in, P_out)
    return jnp.transpose(W, (0, 2, 1, 3)).reshape(I * P, O * P)


def _round_up(a, b):
    return ((a + b - 1) // b) * b


def _choose_row_block(R, S):
    """Rows per grid step: a multiple of lcm(8, S) (sublane alignment + the resident pe
    tile must line up with the s = row % S cycling), capped at ROW_BLOCK_MAX, and split
    so the grid has >= 2 steps when possible (v7x megacore: a 1-step grid leaves a TC idle)."""
    step = math.lcm(8, S)
    if step > ROW_BLOCK_MAX:
        return step                                   # alignment wins over the cap (huge S)
    row_block = min(ROW_BLOCK_MAX // step, -(-R // step)) * step
    if _round_up(R, row_block) == row_block and row_block >= 2 * step:
        row_block = -(-R // (2 * step)) * step        # halve (still aligned) -> >= 2 steps
    return row_block


def patchtst_embed_pe(x, w1, b1, w2, b2, pe, *, patch_len, single_buffer_constants=True):
    """x: (B, L, C); returns (B, C, S, 32*patch_len) = patch embedding + positional embedding."""
    B, L, C = x.shape
    P = patch_len
    S = L // P
    EMB = C2_OUT * P
    x = x.astype(jnp.float32)

    # patchify 'b (s p) c -> b c s p', then flatten rows (b, c, s) -> (R, P); s is minor.
    xp = x.reshape(B, S, P, C).transpose(0, 3, 1, 2).reshape(B * C * S, P)
    R = B * C * S

    row_block = _choose_row_block(R, S)
    R_pad = _round_up(R, row_block)
    if R_pad != R:
        xp = jnp.pad(xp, ((0, R_pad - R), (0, 0)))

    # Toeplitz conv matrices + lane-expanded biases (plain-JAX glue, built once).
    W1 = _conv_toeplitz(w1.astype(jnp.float32), P)                     # (P, 8P)
    W2 = _conv_toeplitz(w2.astype(jnp.float32), P)                     # (8P, 32P)
    b1w = jnp.repeat(b1.astype(jnp.float32), P).reshape(1, C1_OUT * P)
    b2w = jnp.repeat(b2.astype(jnp.float32), P).reshape(1, EMB)

    # Single VMEM-resident pe tile: row j of every block has s = j % S (row_block % S == 0
    # and every block starts at a multiple of row_block, hence of S). Padded tail rows pick
    # up a harmless pe value and are sliced off below.
    pe_tile = jnp.tile(pe.astype(jnp.float32).reshape(S, EMB), (row_block // S, 1))

    # Constant-index operands: single-buffer them (second pipeline buffer is pure VMEM waste).
    const_kw = {}
    if single_buffer_constants and hasattr(pl, "Buffered"):
        const_kw = dict(pipeline_mode=pl.Buffered(1))

    grid = (R_pad // row_block,)
    flops = 2 * R_pad * (P * (C1_OUT * P) + (C1_OUT * P) * EMB)
    bytes_accessed = 4 * (
        R_pad * P + R_pad * EMB                                   # x in, out
        + row_block * EMB                                         # resident pe tile
        + P * C1_OUT * P + C1_OUT * P * EMB + C1_OUT * P + EMB    # weights + biases
    )

    out = pl.pallas_call(
        _patch_embed_kernel,
        out_shape=jax.ShapeDtypeStruct((R_pad, EMB), jnp.float32),
        grid=grid,
        in_specs=[
            pl.BlockSpec((row_block, P), lambda i: (i, 0)),
            pl.BlockSpec((P, C1_OUT * P), lambda i: (0, 0), **const_kw),
            pl.BlockSpec((1, C1_OUT * P), lambda i: (0, 0), **const_kw),
            pl.BlockSpec((C1_OUT * P, EMB), lambda i: (0, 0), **const_kw),
            pl.BlockSpec((1, EMB), lambda i: (0, 0), **const_kw),
            pl.BlockSpec((row_block, EMB), lambda i: (0, 0), **const_kw),
        ],
        out_specs=pl.BlockSpec((row_block, EMB), lambda i: (i, 0)),
        compiler_params=pltpu.CompilerParams(
            dimension_semantics=("parallel",),
            vmem_limit_bytes=VMEM_LIMIT_BYTES,
        ),
        cost_estimate=pl.CostEstimate(
            flops=flops, transcendentals=0, bytes_accessed=bytes_accessed
        ),
    )(xp, W1, b1w, W2, b2w, pe_tile)

    # TODO(synk): the x_transformers Encoder(dim, depth, heads, sandwich_norm=True) stack is
    # not provided; this produces the encoder input (patch embedding + pe), '(b c s) e -> b c s e'.
    # TODO(synk): for patch_len >= ~48 the resident (8P, 32P) W2 grows as P^2 — tile the EMB axis
    # with an extra grid dim (or store W2 in bf16) to stay within v7x's 64 MiB VMEM.
    return out[:R].reshape(B, C, S, EMB)


def _reference(x, w1, b1, w2, b2, pe, patch_len):
    """Pure-JAX reference using lax.conv (mirrors torch Conv1d cross-correlation)."""
    B, L, C = x.shape
    P = patch_len
    S = L // P
    x = x.astype(jnp.float32)
    xp = x.reshape(B, S, P, C).transpose(0, 3, 1, 2)               # (B, C, S, P)
    xn = xp.reshape(B * C * S, 1, P)                               # '(b c s) 1 p'
    dn = ("NCH", "OIH", "NCH")
    y1 = lax.conv_general_dilated(xn, w1, (1,), [(1, 1)], dimension_numbers=dn)
    y1 = jnp.maximum(y1 + b1.reshape(1, -1, 1), 0.0)
    y2 = lax.conv_general_dilated(y1, w2, (1,), [(1, 1)], dimension_numbers=dn)
    y2 = jnp.maximum(y2 + b2.reshape(1, -1, 1), 0.0)               # (N, 32, P)
    emb = y2.reshape(B * C, S, C2_OUT * P) + pe                    # + self.pe
    return emb.reshape(B, C, S, C2_OUT * P)


if __name__ == "__main__":
    # Shapes implied by the module: seq_len=32, num_channels=4, patch_len=8,
    # embedding_dim = 32 * patch_len = 256 (required by the 'cnn' embed mode), batch=2.
    B, C, L, P = 2, 4, 32, 8
    S = L // P
    EMB = C2_OUT * P

    key = jax.random.PRNGKey(0)
    kx, k1, k2, k3, k4, kpe = jax.random.split(key, 6)
    x = jax.random.normal(kx, (B, L, C), jnp.float32)
    w1 = 0.3 * jax.random.normal(k1, (C1_OUT, 1, KSIZE), jnp.float32)       # Conv1d(1,8,3) weight
    b1 = 0.1 * jax.random.normal(k2, (C1_OUT,), jnp.float32)                # Conv1d(1,8,3) bias
    w2 = 0.1 * jax.random.normal(k3, (C2_OUT, C1_OUT, KSIZE), jnp.float32)  # Conv1d(8,32,3) weight
    b2 = 0.1 * jax.random.normal(k4, (C2_OUT,), jnp.float32)                # Conv1d(8,32,3) bias
    pe = jax.random.normal(kpe, (1, S, EMB), jnp.float32)                   # self.pe

    try:
        fn = jax.jit(functools.partial(patchtst_embed_pe, patch_len=P))
        out = jax.block_until_ready(fn(x, w1, b1, w2, b2, pe))
    except Exception:
        # Portability guard: retry with default double-buffered constant operands if this
        # jax build rejects pipeline_mode=pl.Buffered(1). Kernel math is identical.
        fn = jax.jit(functools.partial(
            patchtst_embed_pe, patch_len=P, single_buffer_constants=False))
        out = jax.block_until_ready(fn(x, w1, b1, w2, b2, pe))

    ref = _reference(x, w1, b1, w2, b2, pe, P)
    assert out.shape == (B, C, S, EMB), out.shape
    err = float(jnp.max(jnp.abs(out - ref)))
    assert jnp.allclose(out, ref, atol=1e-4, rtol=1e-4), err
    print("KERNEL_OK")
</pallas_src>

<mosaic_0001>
module attributes {stable_mosaic.version = 11 : i64} {
  func.func @_patch_embed_kernel(%arg0: i32, %arg1: memref<16x8xf32, #tpu.memory_space<vmem>>, %arg2: memref<8x64xf32, #tpu.memory_space<vmem>>, %arg3: memref<1x64xf32, #tpu.memory_space<vmem>>, %arg4: memref<64x256xf32, #tpu.memory_space<vmem>>, %arg5: memref<1x256xf32, #tpu.memory_space<vmem>>, %arg6: memref<16x256xf32, #tpu.memory_space<vmem>>, %arg7: memref<16x256xf32, #tpu.memory_space<vmem>>) attributes {dimension_semantics = [#tpu.dimension_semantics<parallel>], iteration_bounds = array<i64: 2>, scalar_prefetch = 0 : i64, scratch_operands = 0 : i64, tpu.core_type = #tpu.core_type<tc>, window_params = [{transform_indices = @transform_0, window_bounds = array<i64: 16, 8>}, {pipeline_mode = #tpu.pipeline_mode<synchronous>, transform_indices = @transform_1, window_bounds = array<i64: 8, 64>}, {pipeline_mode = #tpu.pipeline_mode<synchronous>, transform_indices = @transform_2, window_bounds = array<i64: 1, 64>}, {pipeline_mode = #tpu.pipeline_mode<synchronous>, transform_indices = @transform_3, window_bounds = array<i64: 64, 256>}, {pipeline_mode = #tpu.pipeline_mode<synchronous>, transform_indices = @transform_4, window_bounds = array<i64: 1, 256>}, {pipeline_mode = #tpu.pipeline_mode<synchronous>, transform_indices = @transform_5, window_bounds = array<i64: 16, 256>}, {transform_indices = @transform_6, window_bounds = array<i64: 16, 256>}]} {
    %c0 = arith.constant 0 : index
    %c0_0 = arith.constant 0 : index
    %0 = vector.load %arg1[%c0, %c0_0] : memref<16x8xf32, #tpu.memory_space<vmem>>, vector<16x8xf32>
    %c0_1 = arith.constant 0 : index
    %c0_2 = arith.constant 0 : index
    %1 = vector.load %arg2[%c0_1, %c0_2] : memref<8x64xf32, #tpu.memory_space<vmem>>, vector<8x64xf32>
    %cst = arith.constant dense<0.000000e+00> : vector<16x64xf32>
    %2 = tpu.matmul %0, %1, %cst {dimension_numbers = #tpu.dot_dimension_numbers<[1], [0], [0], [1], [0, 0, 1, 1], [], []>} : vector<16x8xf32>, vector<8x64xf32>, vector<16x64xf32> -> vector<16x64xf32>
    %c0_3 = arith.constant 0 : index
    %c0_4 = arith.constant 0 : index
    %3 = vector.load %arg3[%c0_3, %c0_4] : memref<1x64xf32, #tpu.memory_space<vmem>>, vector<1x64xf32>
    %4 = vector.broadcast %3 : vector<1x64xf32> to vector<16x64xf32>
    %5 = arith.addf %2, %4 : vector<16x64xf32>
    %cst_5 = arith.constant 0.000000e+00 : f32
    %6 = vector.broadcast %cst_5 : f32 to vector<16x64xf32>
    %7 = arith.maximumf %5, %6 : vector<16x64xf32>
    %c0_6 = arith.constant 0 : index
    %c0_7 = arith.constant 0 : index
    %8 = vector.load %arg4[%c0_6, %c0_7] : memref<64x256xf32, #tpu.memory_space<vmem>>, vector<64x256xf32>
    %cst_8 = arith.constant dense<0.000000e+00> : vector<16x256xf32>
    %9 = tpu.matmul %7, %8, %cst_8 {dimension_numbers = #tpu.dot_dimension_numbers<[1], [0], [0], [1], [0, 0, 1, 1], [], []>} : vector<16x64xf32>, vector<64x256xf32>, vector<16x256xf32> -> vector<16x256xf32>
    %c0_9 = arith.constant 0 : index
    %c0_10 = arith.constant 0 : index
    %10 = vector.load %arg5[%c0_9, %c0_10] : memref<1x256xf32, #tpu.memory_space<vmem>>, vector<1x256xf32>
    %11 = vector.broadcast %10 : vector<1x256xf32> to vector<16x256xf32>
    %12 = arith.addf %9, %11 : vector<16x256xf32>
    %cst_11 = arith.constant 0.000000e+00 : f32
    %13 = vector.broadcast %cst_11 : f32 to vector<16x256xf32>
    %14 = arith.maximumf %12, %13 : vector<16x256xf32>
    %c0_12 = arith.constant 0 : index
    %c0_13 = arith.constant 0 : index
    %15 = vector.load %arg6[%c0_12, %c0_13] : memref<16x256xf32, #tpu.memory_space<vmem>>, vector<16x256xf32>
    %16 = arith.addf %14, %15 : vector<16x256xf32>
    %c0_14 = arith.constant 0 : index
    %c0_15 = arith.constant 0 : index
    %17 = vector.load %arg7[%c0_14, %c0_15] : memref<16x256xf32, #tpu.memory_space<vmem>>, vector<16x256xf32>
    tpu.vector_store %arg7[%c0_14, %c0_15], %16 {strides = array<i32>} : memref<16x256xf32, #tpu.memory_space<vmem>>, vector<16x256xf32>,
    return
  }
  func.func @transform_0(%arg0: i32) -> (i32, i32) {
    %c0_i32 = arith.constant 0 : i32
    %c0_i32_0 = arith.constant 0 : i32
    return %arg0, %c0_i32 : i32, i32
  }
  func.func @transform_1(%arg0: i32) -> (i32, i32) {
    %c0_i32 = arith.constant 0 : i32
    %c0_i32_0 = arith.constant 0 : i32
    %c0_i32_1 = arith.constant 0 : i32
    return %c0_i32, %c0_i32_0 : i32, i32
  }
  func.func @transform_2(%arg0: i32) -> (i32, i32) {
    %c0_i32 = arith.constant 0 : i32
    %c0_i32_0 = arith.constant 0 : i32
    %c0_i32_1 = arith.constant 0 : i32
    return %c0_i32, %c0_i32_0 : i32, i32
  }
  func.func @transform_3(%arg0: i32) -> (i32, i32) {
    %c0_i32 = arith.constant 0 : i32
    %c0_i32_0 = arith.constant 0 : i32
    %c0_i32_1 = arith.constant 0 : i32
    return %c0_i32, %c0_i32_0 : i32, i32
  }
  func.func @transform_4(%arg0: i32) -> (i32, i32) {
    %c0_i32 = arith.constant 0 : i32
    %c0_i32_0 = arith.constant 0 : i32
    %c0_i32_1 = arith.constant 0 : i32
    return %c0_i32, %c0_i32_0 : i32, i32
  }
  func.func @transform_5(%arg0: i32) -> (i32, i32) {
    %c0_i32 = arith.constant 0 : i32
    %c0_i32_0 = arith.constant 0 : i32
    %c0_i32_1 = arith.constant 0 : i32
    return %c0_i32, %c0_i32_0 : i32, i32
  }
  func.func @transform_6(%arg0: i32) -> (i32, i32) {
    %c0_i32 = arith.constant 0 : i32
    %c0_i32_0 = arith.constant 0 : i32
    return %arg0, %c0_i32 : i32, i32
  }
}

module attributes {stable_mosaic.version = 11 : i64} {
  func.func @_patch_embed_kernel(%arg0: i32, %arg1: memref<16x8xf32, #tpu.memory_space<vmem>>, %arg2: memref<8x64xf32, #tpu.memory_space<vmem>>, %arg3: memref<1x64xf32, #tpu.memory_space<vmem>>, %arg4: memref<64x256xf32, #tpu.memory_space<vmem>>, %arg5: memref<1x256xf32, #tpu.memory_space<vmem>>, %arg6: memref<16x256xf32, #tpu.memory_space<vmem>>, %arg7: memref<16x256xf32, #tpu.memory_space<vmem>>) attributes {dimension_semantics = [#tpu.dimension_semantics<parallel>], iteration_bounds = array<i64: 2>, scalar_prefetch = 0 : i64, scratch_operands = 0 : i64, tpu.core_type = #tpu.core_type<tc>, window_params = [{transform_indices = @transform_0, window_bounds = array<i64: 16, 8>}, {pipeline_mode = #tpu.pipeline_mode<synchronous>, transform_indices = @transform_1, window_bounds = array<i64: 8, 64>}, {pipeline_mode = #tpu.pipeline_mode<synchronous>, transform_indices = @transform_2, window_bounds = array<i64: 1, 64>}, {pipeline_mode = #tpu.pipeline_mode<synchronous>, transform_indices = @transform_3, window_bounds = array<i64: 64, 256>}, {pipeline_mode = #tpu.pipeline_mode<synchronous>, transform_indices = @transform_4, window_bounds = array<i64: 1, 256>}, {pipeline_mode = #tpu.pipeline_mode<synchronous>, transform_indices = @transform_5, window_bounds = array<i64: 16, 256>}, {transform_indices = @transform_6, window_bounds = array<i64: 16, 256>}]} {
    %c0 = arith.constant 0 : index
    %c0_0 = arith.constant 0 : index
    %0 = vector.load %arg1[%c0, %c0_0] : memref<16x8xf32, #tpu.memory_space<vmem>>, vector<16x8xf32>
    %c0_1 = arith.constant 0 : index
    %c0_2 = arith.constant 0 : index
    %1 = vector.load %arg2[%c0_1, %c0_2] : memref<8x64xf32, #tpu.memory_space<vmem>>, vector<8x64xf32>
    %cst = arith.constant dense<0.000000e+00> : vector<16x64xf32>
    %2 = tpu.matmul %0, %1, %cst {dimension_numbers = #tpu.dot_dimension_numbers<[1], [0], [0], [1], [0, 0, 1, 1], [], []>} : vector<16x8xf32>, vector<8x64xf32>, vector<16x64xf32> -> vector<16x64xf32>
    %c0_3 = arith.constant 0 : index
    %c0_4 = arith.constant 0 : index
    %3 = vector.load %arg3[%c0_3, %c0_4] : memref<1x64xf32, #tpu.memory_space<vmem>>, vector<1x64xf32>
    %4 = vector.broadcast %3 : vector<1x64xf32> to vector<16x64xf32>
    %5 = arith.addf %2, %4 : vector<16x64xf32>
    %cst_5 = arith.constant 0.000000e+00 : f32
    %6 = vector.broadcast %cst_5 : f32 to vector<16x64xf32>
    %7 = arith.maximumf %5, %6 : vector<16x64xf32>
    %c0_6 = arith.constant 0 : index
    %c0_7 = arith.constant 0 : index
    %8 = vector.load %arg4[%c0_6, %c0_7] : memref<64x256xf32, #tpu.memory_space<vmem>>, vector<64x256xf32>
    %cst_8 = arith.constant dense<0.000000e+00> : vector<16x256xf32>
    %9 = tpu.matmul %7, %8, %cst_8 {dimension_numbers = #tpu.dot_dimension_numbers<[1], [0], [0], [1], [0, 0, 1, 1], [], []>} : vector<16x64xf32>, vector<64x256xf32>, vector<16x256xf32> -> vector<16x256xf32>
    %c0_9 = arith.constant 0 : index
    %c0_10 = arith.constant 0 : index
    %10 = vector.load %arg5[%c0_9, %c0_10] : memref<1x256xf32, #tpu.memory_space<vmem>>, vector<1x256xf32>
    %11 = vector.broadcast %10 : vector<1x256xf32> to vector<16x256xf32>
    %12 = arith.addf %9, %11 : vector<16x256xf32>
    %cst_11 = arith.constant 0.000000e+00 : f32
    %13 = vector.broadcast %cst_11 : f32 to vector<16x256xf32>
    %14 = arith.maximumf %12, %13 : vector<16x256xf32>
    %c0_12 = arith.constant 0 : index
    %c0_13 = arith.constant 0 : index
    %15 = vector.load %arg6[%c0_12, %c0_13] : memref<16x256xf32, #tpu.memory_space<vmem>>, vector<16x256xf32>
    %16 = arith.addf %14, %15 : vector<16x256xf32>
    %c0_14 = arith.constant 0 : index
    %c0_15 = arith.constant 0 : index
    %17 = vector.load %arg7[%c0_14, %c0_15] : memref<16x256xf32, #tpu.memory_space<vmem>>, vector<16x256xf32>
    tpu.vector_store %arg7[%c0_14, %c0_15], %16 {strides = array<i32>} : memref<16x256xf32, #tpu.memory_space<vmem>>, vector<16x256xf32>,
    return
  }
  func.func @transform_0(%arg0: i32) -> (i32, i32) {
    %c0_i32 = arith.constant 0 : i32
    %c0_i32_0 = arith.constant 0 : i32
    return %arg0, %c0_i32 : i32, i32
  }
  func.func @transform_1(%arg0: i32) -> (i32, i32) {
    %c0_i32 = arith.constant 0 : i32
    %c0_i32_0 = arith.constant 0 : i32
    %c0_i32_1 = arith.constant 0 : i32
    return %c0_i32, %c0_i32_0 : i32, i32
  }
  func.func @transform_2(%arg0: i32) -> (i32, i32) {
    %c0_i32 = arith.constant 0 : i32
    %c0_i32_0 = arith.constant 0 : i32
    %c0_i32_1 = arith.constant 0 : i32
    return %c0_i32, %c0_i32_0 : i32, i32
  }
  func.func @transform_3(%arg0: i32) -> (i32, i32) {
    %c0_i32 = arith.constant 0 : i32
    %c0_i32_0 = arith.constant 0 : i32
    %c0_i32_1 = arith.constant 0 : i32
    return %c0_i32, %c0_i32_0 : i32, i32
  }
  func.func @transform_4(%arg0: i32) -> (i32, i32) {
    %c0_i32 = arith.constant 0 : i32
    %c0_i32_0 = arith.constant 0 : i32
    %c0_i32_1 = arith.constant 0 : i32
    return %c0_i32, %c0_i32_0 : i32, i32
  }
  func.func @transform_5(%arg0: i32) -> (i32, i32) {
    %c0_i32 = arith.constant 0 : i32
    %c0_i32_0 = arith.constant 0 : i32
    %c0_i32_1 = arith.constant 0 : i32
    return %c0_i32, %c0_i32_0 : i32, i32
  }
  func.func @transform_6(%arg0: i32) -> (i32, i32) {
    %c0_i32 = arith.constant 0 : i32
    %c0_i32_0 = arith.constant 0 : i32
    return %arg0, %c0_i32 : i32, i32
  }
}

</mosaic_0001>

<llo_original>
// kernel: tile.7
$region0: #{tile.7}
  %s0 = inlined_call_operand.vmem [shape: f32[4,4,256], index: 0, kind: input, shape index: {}]
  %s1 = inlined_call_operand.vmem [shape: f32[16,256], index: 1, kind: output, shape index: {}]
  $region1: #{tile.7} parent=0
    #allocation0 [shape = 'u8[32768]{0}', space=vmem, size = 0x8000, scoped, tag = 'scoped mem for input reshape']
    %s3 = ssub.s32 16, 1
    %s4 = scalar_lea.vmem %s0, 28
    %v5 = vld [vmem:[%s4] sm:%s3]
    %s6 = scalar_lea.vmem [#allocation0], 56
    %7 = vst [vmem:[%s6] sm:%s3] %v5
    %s8 = scalar_lea.vmem %s0, 24
    %v9 = vld [vmem:[%s8] sm:%s3]
    %s10 = scalar_lea.vmem [#allocation0], 48
    %11 = vst [vmem:[%s10] sm:%s3] %v9
    %s12 = scalar_lea.vmem %s0, 20
    %v13 = vld [vmem:[%s12] sm:%s3]
    %s14 = scalar_lea.vmem [#allocation0], 40
    %15 = vst [vmem:[%s14] sm:%s3] %v13
    %s16 = scalar_lea.vmem %s0, 16
    %v17 = vld [vmem:[%s16] sm:%s3]
    %s18 = scalar_lea.vmem [#allocation0], 32
    %19 = vst [vmem:[%s18] sm:%s3] %v17
    %s20 = scalar_lea.vmem %s0, 12
    %v21 = vld [vmem:[%s20] sm:%s3]
    %s22 = scalar_lea.vmem [#allocation0], 24
    %23 = vst [vmem:[%s22] sm:%s3] %v21
    %s24 = scalar_lea.vmem %s0, 8
    %v25 = vld [vmem:[%s24] sm:%s3]
    %s26 = scalar_lea.vmem [#allocation0], 16
    %27 = vst [vmem:[%s26] sm:%s3] %v25
    %s28 = scalar_lea.vmem %s0, 4
    %v29 = vld [vmem:[%s28] sm:%s3]
    %s30 = scalar_lea.vmem [#allocation0], 8
    %31 = vst [vmem:[%s30] sm:%s3] %v29
    %v32 = vld [vmem:[%s0] sm:%s3]
    %33 = vst [vmem:[#allocation0] sm:%s3] %v32
    %v34 = vld [vmem:[#allocation0] sm:$0xf]
    %35 = vst [vmem:[%s1] sm:$0xf] %v34
    %s36 = scalar_lea.vmem [#allocation0], 8
    %v37 = vld [vmem:[%s36] sm:$0xf]
    %s38 = scalar_lea.vmem %s1, 8
    %39 = vst [vmem:[%s38] sm:$0xf] %v37
    %s40 = scalar_lea.vmem [#allocation0], 16
    %v41 = vld [vmem:[%s40] sm:$0xf]
    %s42 = scalar_lea.vmem %s1, 4
    %43 = vst [vmem:[%s42] sm:$0xf] %v41
    %s44 = scalar_lea.vmem [#allocation0], 24
    %v45 = vld [vmem:[%s44] sm:$0xf]
    %s46 = scalar_lea.vmem %s1, 12
    %47 = vst [vmem:[%s46] sm:$0xf] %v45
    %s48 = scalar_lea.vmem [#allocation0], 32
    %v49 = vld [vmem:[%s48] sm:$0xf]
    %s50 = scalar_lea.vmem %s1, 16
    %51 = vst [vmem:[%s50] sm:$0xf] %v49
    %s52 = scalar_lea.vmem [#allocation0], 40
    %v53 = vld [vmem:[%s52] sm:$0xf]
    %s54 = scalar_lea.vmem %s1, 24
    %55 = vst [vmem:[%s54] sm:$0xf] %v53
    %s56 = scalar_lea.vmem [#allocation0], 48
    %v57 = vld [vmem:[%s56] sm:$0xf]
    %s58 = scalar_lea.vmem %s1, 20
    %59 = vst [vmem:[%s58] sm:$0xf] %v57
    %s60 = scalar_lea.vmem [#allocation0], 56
    %v61 = vld [vmem:[%s60] sm:$0xf]
    %s62 = scalar_lea.vmem %s1, 28
    %63 = vst [vmem:[%s62] sm:$0xf] %v61

// kernel: patchtst_embed_pe.1
$region0: #{patchtst_embed_pe.1}
  #allocation0 [shape = 'u32[]', space=smem, size = 0x4, offset = 0x4, fixed_abs, tag = 'smem constant byte address 0x4 - core index']
  #allocation1 [shape = 'u32[72,128]{1,0:T(1,128)}', space=vmem, size = 0x9000, scoped, tag = 'internal scratch']
  %s0 = inlined_call_operand.vmem [shape: f32[32,8], index: 0, kind: input, shape index: {}]
  %s1 = inlined_call_operand.vmem [shape: f32[8,64], index: 1, kind: input, shape index: {}]
  %s2 = inlined_call_operand.vmem [shape: f32[1,64], index: 2, kind: input, shape index: {}]
  %s3 = inlined_call_operand.vmem [shape: f32[64,256], index: 3, kind: input, shape index: {}]
  %s4 = inlined_call_operand.vmem [shape: f32[1,256], index: 4, kind: input, shape index: {}]
  %s5 = inlined_call_operand.vmem [shape: f32[16,256], index: 5, kind: input, shape index: {}]
  %s6 = inlined_call_operand.vmem [shape: f32[32,256], index: 6, kind: output, shape index: {}]
  %s7 = sld [smem:[#allocation0]]
  $region57: #{patchtst_embed_pe.1} parent=0
    _
  %s9 = ssub.s32 1, %s7
  %s10 = scalar_select 0, %s9, %s7
  loop: start=0, step=1, limit=4
  $region2: #{patchtst_embed_pe.1} parent=0 // loop_pre_header
    _
  $region3: #{patchtst_embed_pe.1} parent=0 // loop_header
    %s12 = sphi 0, %s16
    %p13 = scmp.ge.s32.totalorder %s12, 4
    %s22 = sphi 0, %s24
    %s25 = sphi 0, %s22
    %s26 = sphi 0, %s25
    %s42 = sphi 0, %s26
    %s46 = sphi 0, %s46
    %s48 = sphi 0, %s46
    %s49 = sphi 0, %s48
    %s63 = sphi 0, %s49
    %s67 = sphi 0, %s67
    %s69 = sphi 0, %s67
    %s70 = sphi 0, %s69
    %s84 = sphi 0, %s70
    %s88 = sphi 0, %s88
    %s90 = sphi 0, %s88
    %s91 = sphi 0, %s90
    %s105 = sphi 0, %s91
    %s109 = sphi 0, %s109
    %s111 = sphi 0, %s109
    %s112 = sphi 0, %s111
    %s126 = sphi 0, %s112
    %s130 = sphi 0, %s130
    %s132 = sphi 0, %s130
    %s133 = sphi 0, %s132
    %s147 = sphi 0, %s133
    %s153 = sphi 0, %s155
    %s156 = sphi 0, %s153
    %s157 = sphi 0, %s156
    %s173 = sphi 0, %s157
  $region4: #{patchtst_embed_pe.1} parent=0 // loop_header_branch
    %15 = sbr.rel (%p13) target = $region8
  $region5: #{patchtst_embed_pe.1} parent=0 // loop_body
    %s17 = ssub.s32 %s12, 1
    %s18 = ssub.s32 %s12, 2
    %s19 = sadd.s32 %s12, 1
    %s20 = ssub.s32 %s12, %s19
    %p21 = scmp.eq.s32.totalorder %s20, 0
    %s23 = sadd.s32 %s22, 1
    %s24 = scalar_select %p21, %s22, %s23
    %p27 = pneg %p21
    %p28 = scmp.eq.s32.totalorder %s12, 1
    %p29 = por %p27, %p28
    %p30 = scmp.ne.s32.totalorder %s22, %s25
    %p31 = scmp.eq.s32.totalorder %s12, 0
    %p32 = por %p30, %p31
    %p33 = scmp.ne.s32.totalorder %s22, %s25
    %p34 = scmp.eq.s32.totalorder %s17, 1
    %p35 = por %p33, %p34
    %p36 = scmp.ne.s32.totalorder %s25, %s26
    %p37 = scmp.eq.s32.totalorder %s17, 0
    %p38 = por %p36, %p37
    %p39 = scmp.ne.s32.totalorder %s25, %s26
    %p40 = scmp.eq.s32.totalorder %s18, 1
    %p41 = por %p39, %p40
    %p43 = scmp.ne.s32.totalorder %s26, %s42
    %p44 = scmp.eq.s32.totalorder %s18, 0
    %p45 = por %p43, %p44
    %s47 = sadd.s32 %s46, 1
    %p50 = scmp.eq.s32.totalorder %s12, 1
    %p51 = scmp.ne.s32.totalorder %s46, %s48
    %p52 = scmp.eq.s32.totalorder %s12, 0
    %p53 = por %p51, %p52
    %p54 = scmp.ne.s32.totalorder %s46, %s48
    %p55 = scmp.eq.s32.totalorder %s17, 1
    %p56 = por %p54, %p55
    %p57 = scmp.ne.s32.totalorder %s48, %s49
    %p58 = scmp.eq.s32.totalorder %s17, 0
    %p59 = por %p57, %p58
    %p60 = scmp.ne.s32.totalorder %s48, %s49
    %p61 = scmp.eq.s32.totalorder %s18, 1
    %p62 = por %p60, %p61
    %p64 = scmp.ne.s32.totalorder %s49, %s63
    %p65 = scmp.eq.s32.totalorder %s18, 0
    %p66 = por %p64, %p65
    %s68 = sadd.s32 %s67, 1
    %p71 = scmp.eq.s32.totalorder %s12, 1
    %p72 = scmp.ne.s32.totalorder %s67, %s69
    %p73 = scmp.eq.s32.totalorder %s12, 0
    %p74 = por %p72, %p73
    %p75 = scmp.ne.s32.totalorder %s67, %s69
    %p76 = scmp.eq.s32.totalorder %s17, 1
    %p77 = por %p75, %p76
    %p78 = scmp.ne.s32.totalorder %s69, %s70
    %p79 = scmp.eq.s32.totalorder %s17, 0
    %p80 = por %p78, %p79
    %p81 = scmp.ne.s32.totalorder %s69, %s70
    %p82 = scmp.eq.s32.totalorder %s18, 1
    %p83 = por %p81, %p82
    %p85 = scmp.ne.s32.totalorder %s70, %s84
    %p86 = scmp.eq.s32.totalorder %s18, 0
    %p87 = por %p85, %p86
    %s89 = sadd.s32 %s88, 1
    %p92 = scmp.eq.s32.totalorder %s12, 1
    %p93 = scmp.ne.s32.totalorder %s88, %s90
    %p94 = scmp.eq.s32.totalorder %s12, 0
    %p95 = por %p93, %p94
    %p96 = scmp.ne.s32.totalorder %s88, %s90
    %p97 = scmp.eq.s32.totalorder %s17, 1
    %p98 = por %p96, %p97
    %p99 = scmp.ne.s32.totalorder %s90, %s91
    %p100 = scmp.eq.s32.totalorder %s17, 0
    %p101 = por %p99, %p100
    %p102 = scmp.ne.s32.totalorder %s90, %s91
    %p103 = scmp.eq.s32.totalorder %s18, 1
    %p104 = por %p102, %p103
    %p106 = scmp.ne.s32.totalorder %s91, %s105
    %p107 = scmp.eq.s32.totalorder %s18, 0
    %p108 = por %p106, %p107
    %s110 = sadd.s32 %s109, 1
    %p113 = scmp.eq.s32.totalorder %s12, 1
    %p114 = scmp.ne.s32.totalorder %s109, %s111
    %p115 = scmp.eq.s32.totalorder %s12, 0
    %p116 = por %p114, %p115
    %p117 = scmp.ne.s32.totalorder %s109, %s111
    %p118 = scmp.eq.s32.totalorder %s17, 1
    %p119 = por %p117, %p118
    %p120 = scmp.ne.s32.totalorder %s111, %s112
    %p121 = scmp.eq.s32.totalorder %s17, 0
    %p122 = por %p120, %p121
    %p123 = scmp.ne.s32.totalorder %s111, %s112
    %p124 = scmp.eq.s32.totalorder %s18, 1
    %p125 = por %p123, %p124
    %p127 = scmp.ne.s32.totalorder %s112, %s126
    %p128 = scmp.eq.s32.totalorder %s18, 0
    %p129 = por %p127, %p128
    %s131 = sadd.s32 %s130, 1
    %p134 = scmp.eq.s32.totalorder %s12, 1
    %p135 = scmp.ne.s32.totalorder %s130, %s132
    %p136 = scmp.eq.s32.totalorder %s12, 0
    %p137 = por %p135, %p136
    %p138 = scmp.ne.s32.totalorder %s130, %s132
    %p139 = scmp.eq.s32.totalorder %s17, 1
    %p140 = por %p138, %p139
    %p141 = scmp.ne.s32.totalorder %s132, %s133
    %p142 = scmp.eq.s32.totalorder %s17, 0
    %p143 = por %p141, %p142
    %p144 = scmp.ne.s32.totalorder %s132, %s133
    %p145 = scmp.eq.s32.totalorder %s18, 1
    %p146 = por %p144, %p145
    %p148 = scmp.ne.s32.totalorder %s133, %s147
    %p149 = scmp.eq.s32.totalorder %s18, 0
    %p150 = por %p148, %p149
    %s151 = ssub.s32 %s12, %s19
    %p152 = scmp.eq.s32.totalorder %s151, 0
    %s154 = sadd.s32 %s153, 1
    %s155 = scalar_select %p152, %s153, %s154
    %p158 = pneg %p152
    %p159 = scmp.eq.s32.totalorder %s12, 1
    %p160 = por %p158, %p159
    %p161 = scmp.ne.s32.totalorder %s153, %s156
    %p162 = scmp.eq.s32.totalorder %s12, 0
    %p163 = por %p161, %p162
    %p164 = scmp.ne.s32.totalorder %s153, %s156
    %p165 = scmp.eq.s32.totalorder %s17, 1
    %p166 = por %p164, %p165
    %p167 = scmp.ne.s32.totalorder %s156, %s157
    %p168 = scmp.eq.s32.totalorder %s17, 0
    %p169 = por %p167, %p168
    %p170 = scmp.ne.s32.totalorder %s156, %s157
    %p171 = scmp.eq.s32.totalorder %s18, 1
    %p172 = por %p170, %p171
    %p174 = scmp.ne.s32.totalorder %s157, %s173
    %p175 = scmp.eq.s32.totalorder %s18, 0
    %p176 = por %p174, %p175
    %p177 = scmp.le.s32.totalorder 1, %s12
    %p178 = scmp.lt.s32.totalorder %s12, 3
    %p179 = pnand %p177, %p178
    %p180 = pneg %p179
    // Predicated region
    $region9: #{patchtst_embed_pe.1} parent=5 // pred_check
      _
    $region10: #{patchtst_embed_pe.1} parent=5 // pred_check_branch
      %182 = sbr.rel (%p179) target = $region12
    $region11: #{patchtst_embed_pe.1} parent=5 // pred_region
      %s183 = ssub.s32 %s12, 1
      // Predicated region
      $region13: #{patchtst_embed_pe.1} parent=11 // pred_check
        %p184 = pneg %p59
      $region14: #{patchtst_embed_pe.1} parent=11 // pred_check_branch
        %186 = sbr.rel (%p184) target = $region16
      $region15: #{patchtst_embed_pe.1} parent=11 // pred_region
        _
      $region16: #{patchtst_embed_pe.1} parent=11 // pred_fallthru
        _
      // Predicated region
      $region17: #{patchtst_embed_pe.1} parent=11 // pred_check
        %p187 = pneg %p80
      $region18: #{patchtst_embed_pe.1} parent=11 // pred_check_branch
        %189 = sbr.rel (%p187) target = $region20
      $region19: #{patchtst_embed_pe.1} parent=11 // pred_region
        _
      $region20: #{patchtst_embed_pe.1} parent=11 // pred_fallthru
        _
      // Predicated region
      $region21: #{patchtst_embed_pe.1} parent=11 // pred_check
        %p190 = pneg %p101
      $region22: #{patchtst_embed_pe.1} parent=11 // pred_check_branch
        %192 = sbr.rel (%p190) target = $region24
      $region23: #{patchtst_embed_pe.1} parent=11 // pred_region
        _
      $region24: #{patchtst_embed_pe.1} parent=11 // pred_fallthru
        _
      // Predicated region
      $region25: #{patchtst_embed_pe.1} parent=11 // pred_check
        %p193 = pneg %p122
      $region26: #{patchtst_embed_pe.1} parent=11 // pred_check_branch
        %195 = sbr.rel (%p193) target = $region28
      $region27: #{patchtst_embed_pe.1} parent=11 // pred_region
        _
      $region28: #{patchtst_embed_pe.1} parent=11 // pred_fallthru
        _
      // Predicated region
      $region29: #{patchtst_embed_pe.1} parent=11 // pred_check
        %p196 = pneg %p143
      $region30: #{patchtst_embed_pe.1} parent=11 // pred_check_branch
        %198 = sbr.rel (%p196) target = $region32
      $region31: #{patchtst_embed_pe.1} parent=11 // pred_region
        _
      $region32: #{patchtst_embed_pe.1} parent=11 // pred_fallthru
        _
    $region12: #{patchtst_embed_pe.1} parent=5 // pred_fallthru
      _
    %p199 = scmp.lt.s32.totalorder %s12, 2
    // Predicated region
    $region33: #{patchtst_embed_pe.1} parent=5 // pred_check
      %p200 = pneg %p199
    $region34: #{patchtst_embed_pe.1} parent=5 // pred_check_branch
      %202 = sbr.rel (%p200) target = $region36
    $region35: #{patchtst_embed_pe.1} parent=5 // pred_region
      // Predicated region
      $region37: #{patchtst_embed_pe.1} parent=35 // pred_check
        %p203 = pneg %p32
      $region38: #{patchtst_embed_pe.1} parent=35 // pred_check_branch
        %205 = sbr.rel (%p203) target = $region40
      $region39: #{patchtst_embed_pe.1} parent=35 // pred_region
        %s206 = smul.u32 2, %s12
        %p207 = scmp.lt.s32.totalorder %s206, 3
        %s208 = scalar_select %p207, %s206, 3
        %s209 = smul.addr %s208, 8
        %s210 = scalar_lea.vmem %s0, %s209
        %s211 = smul.u32 2, %s12
      $region40: #{patchtst_embed_pe.1} parent=35 // pred_fallthru
        _
    $region36: #{patchtst_embed_pe.1} parent=5 // pred_fallthru
      _
    %p212 = scmp.le.s32.totalorder 1, %s12
    %p213 = scmp.lt.s32.totalorder %s12, 3
    %p214 = pnand %p212, %p213
    %p215 = pneg %p214
    // Predicated region
    $region41: #{patchtst_embed_pe.1} parent=5 // pred_check
      _
    $region42: #{patchtst_embed_pe.1} parent=5 // pred_check_branch
      %217 = sbr.rel (%p214) target = $region44
    $region43: #{patchtst_embed_pe.1} parent=5 // pred_region
      %s218 = ssub.s32 %s12, 1
      %s219 = smul.u32 2, %s17
      %p220 = scmp.lt.s32.totalorder %s219, 3
      %s221 = scalar_select %p220, %s219, 3
      %s222 = smul.addr %s221, 8
      %s223 = scalar_lea.vmem %s0, %s222
      %p224 = pneg %p38
      %p225 = pneg %p35
      %p226 = pneg %p59
      %p227 = pneg %p56
      %p228 = pneg %p80
      %p229 = pneg %p77
      %p230 = pneg %p101
      %p231 = pneg %p98
      %p232 = pneg %p122
      %p233 = pneg %p119
      %p234 = pneg %p143
      %p235 = pneg %p140
      %p236 = pneg %p169
      %p237 = pneg %p166
      %s238 = smul.u32 2, %s17
      %p239 = scmp.lt.s32.totalorder %s238, 3
      %s240 = scalar_select %p239, %s238, 3
      %s241 = smul.addr %s240, 2
      %s242 = smul.addr %s241, 8
      %s243 = scalar_lea.vmem %s6, %s242
      %s244 = smul.u32 2, %s17
      %p245 = scmp.lt.s32.totalorder %s244, 3
      %s246 = scalar_select %p245, %s244, 3
      %s247 = smul.addr %s246, 8
      %s248 = scalar_lea.vmem %s0, %s247
      %s249 = smul.u32 2, %s17
      %s250 = smul.u32 2, %s17
      %p251 = scmp.lt.s32.totalorder %s250, 3
      %s252 = scalar_select %p251, %s250, 3
      %s253 = smul.addr %s252, 2
      %s254 = smul.addr %s253, 8
      %s255 = scalar_lea.vmem %s6, %s254
      %s256 = smul.u32 2, %s17
      %v257 = vld [vmem:[%s248] sm:$0xff]
      %v258 = vld [vmem:[%s248 + $0x8] sm:$0xff]
      %v259 = vld [vmem:[%s1] sm:$0xff]
      %v260 = vld [vmem:[%s2] sm:$0x1]
      %v262 = vperm.slane %v260, 0
      %vm264 = vcmask 64512
      %v266 = vsel %vm264, %v257, 0
      %v269 = vsel %vm264, %v258, 0
      %271 = vmatpush.msra.mxu0 0.0
      %272 = vmatpush.msra.mxu0 0.0
      %273 = vmatpush.msra.mxu0 0.0
      %274 = vmatpush.msra.mxu0 0.0
      %275 = vmatpush.msra.mxu0 0.0
      %276 = vmatpush.msra.mxu0 0.0
      %277 = vmatpush.msra.mxu0 0.0
      %278 = vmatpush.msra.mxu0 0.0
      %279 = vmatpush.msra.mxu0 0.0
      %280 = vmatpush.msra.mxu0 0.0
      %281 = vmatpush.msra.mxu0 0.0
      %282 = vmatpush.msra.mxu0 0.0
      %283 = vmatpush.msra.mxu0 0.0
      %284 = vmatpush.msra.mxu0 0.0
      %285 = vmatpush.msra.mxu0 0.0
      %286 = vmatpush.msra.mxu0 %v259
      %287 = vmatmul.f32.gmra.mxu0 %v266
      %v288 = vpop.f32.mrf.mxu0
      %v289 = vadd.f32 %v262, %v288
      %290 = vmatmul.f32.gmra.mxu0 %v269
      %v291 = vpop.f32.mrf.mxu0
      %v292 = vadd.f32 %v262, %v291
      %293 = vdwg.mxu0
      %v294 = vmax.f32 %v289, 0.0
      %v295 = vmax.f32 %v292, 0.0
      %v296 = vld [vmem:[%s3] sm:$0xff]
      %v297 = vld [vmem:[%s3 + $0x8] sm:$0xff]
      %v298 = vld [vmem:[%s3 + $0x10] sm:$0xff]
      %v299 = vld [vmem:[%s3 + $0x18] sm:$0xff]
      %v300 = vld [vmem:[%s3 + $0x20] sm:$0xff]
      %v301 = vld [vmem:[%s3 + $0x28] sm:$0xff]
      %v302 = vld [vmem:[%s3 + $0x30] sm:$0xff]
      %v303 = vld [vmem:[%s3 + $0x38] sm:$0xff]
      %v304 = vld [vmem:[%s3 + $0x40] sm:$0xff]
      %v305 = vld [vmem:[%s3 + $0x48] sm:$0xff]
      %v306 = vld [vmem:[%s3 + $0x50] sm:$0xff]
      %v307 = vld [vmem:[%s3 + $0x58] sm:$0xff]
      %v308 = vld [vmem:[%s3 + $0x60] sm:$0xff]
      %v309 = vld [vmem:[%s3 + $0x68] sm:$0xff]
      %v310 = vld [vmem:[%s3 + $0x70] sm:$0xff]
      %v311 = vld [vmem:[%s3 + $0x78] sm:$0xff]
      %v312 = vld [vmem:[%s4] sm:$0x3]
      %v314 = vperm.slane %v312, 0
      %v315 = vperm.slane %v312, 1
      %vm318 = vcmask 523264
      %v320 = vsel %vm318, %v294, 0
      %v323 = vsel %vm318, %v295, 0
      %325 = vmatpush.msra.mxu0 0.0
      %326 = vmatpush.msra.mxu0 0.0
      %327 = vmatpush.msra.mxu0 0.0
      %328 = vmatpush.msra.mxu0 0.0
      %329 = vmatpush.msra.mxu0 0.0
      %330 = vmatpush.msra.mxu0 0.0
      %331 = vmatpush.msra.mxu0 0.0
      %332 = vmatpush.msra.mxu0 0.0
      %333 = vmatpush.msra.mxu0 %v310
      %334 = vmatpush.msra.mxu0 %v308
      %335 = vmatpush.msra.mxu0 %v306
      %336 = vmatpush.msra.mxu0 %v304
      %337 = vmatpush.msra.mxu0 %v302
      %338 = vmatpush.msra.mxu0 %v300
      %339 = vmatpush.msra.mxu0 %v298
      %340 = vmatpush.msra.mxu0 %v296
      %341 = vmatmul.f32.gmra.mxu0 %v320
      %v342 = vpop.f32.mrf.mxu0
      %v343 = vadd.f32 %v314, %v342
      %344 = vmatmul.f32.gmra.mxu0 %v323
      %v345 = vpop.f32.mrf.mxu0
      %v346 = vadd.f32 %v314, %v345
      %347 = vdwg.mxu0
      %348 = vmatpush.msra.mxu0 0.0
      %349 = vmatpush.msra.mxu0 0.0
      %350 = vmatpush.msra.mxu0 0.0
      %351 = vmatpush.msra.mxu0 0.0
      %352 = vmatpush.msra.mxu0 0.0
      %353 = vmatpush.msra.mxu0 0.0
      %354 = vmatpush.msra.mxu0 0.0
      %355 = vmatpush.msra.mxu0 0.0
      %356 = vmatpush.msra.mxu0 %v311
      %357 = vmatpush.msra.mxu0 %v309
      %358 = vmatpush.msra.mxu0 %v307
      %359 = vmatpush.msra.mxu0 %v305
      %360 = vmatpush.msra.mxu0 %v303
      %361 = vmatpush.msra.mxu0 %v301
      %362 = vmatpush.msra.mxu0 %v299
      %363 = vmatpush.msra.mxu0 %v297
      %364 = vmatmul.f32.gmra.mxu0 %v320
      %v365 = vpop.f32.mrf.mxu0
      %v366 = vadd.f32 %v315, %v365
      %367 = vmatmul.f32.gmra.mxu0 %v323
      %v368 = vpop.f32.mrf.mxu0
      %v369 = vadd.f32 %v315, %v368
      %370 = vdwg.mxu0
      %v371 = vmax.f32 %v343, 0.0
      %v372 = vmax.f32 %v366, 0.0
      %v373 = vmax.f32 %v346, 0.0
      %v374 = vmax.f32 %v369, 0.0
      %v375 = vld [vmem:[%s5] sm:$0xff]
      %v376 = vld [vmem:[%s5 + $0x8] sm:$0xff]
      %v377 = vld [vmem:[%s5 + $0x10] sm:$0xff]
      %v378 = vld [vmem:[%s5 + $0x18] sm:$0xff]
      %v379 = vadd.f32 %v371, %v375
      %v380 = vadd.f32 %v372, %v376
      %v381 = vadd.f32 %v373, %v377
      %v382 = vadd.f32 %v374, %v378
      %383 = vst [vmem:[%s255] sm:$0xff] %v379
      %384 = vst [vmem:[%s255 + $0x8] sm:$0xff] %v380
      %385 = vst [vmem:[%s255 + $0x10] sm:$0xff] %v381
      %386 = vst [vmem:[%s255 + $0x18] sm:$0xff] %v382
      %s387 = smul.u32 2, %s17
      %p388 = scmp.lt.s32.totalorder %s387, 3
      %s389 = scalar_select %p388, %s387, 3
      %s390 = smul.addr %s389, 2
      %s391 = smul.addr %s390, 8
      %s392 = scalar_lea.vmem %s6, %s391
      // Predicated region
      $region45: #{patchtst_embed_pe.1} parent=43 // pred_check
        %p393 = pneg %p166
      $region46: #{patchtst_embed_pe.1} parent=43 // pred_check_branch
        %395 = sbr.rel (%p393) target = $region48
      $region47: #{patchtst_embed_pe.1} parent=43 // pred_region
        %s396 = smul.u32 2, %s17
      $region48: #{patchtst_embed_pe.1} parent=43 // pred_fallthru
        _
    $region44: #{patchtst_embed_pe.1} parent=5 // pred_fallthru
      _
    %p397 = scmp.le.s32.totalorder 2, %s12
    // Predicated region
    $region49: #{patchtst_embed_pe.1} parent=5 // pred_check
      %p398 = pneg %p397
    $region50: #{patchtst_embed_pe.1} parent=5 // pred_check_branch
      %400 = sbr.rel (%p398) target = $region52
    $region51: #{patchtst_embed_pe.1} parent=5 // pred_region
      %s401 = ssub.s32 %s12, 2
      // Predicated region
      $region53: #{patchtst_embed_pe.1} parent=51 // pred_check
        %p402 = pneg %p172
      $region54: #{patchtst_embed_pe.1} parent=51 // pred_check_branch
        %404 = sbr.rel (%p402) target = $region56
      $region55: #{patchtst_embed_pe.1} parent=51 // pred_region
        %s405 = smul.u32 2, %s18
        %p406 = scmp.lt.s32.totalorder %s405, 3
        %s407 = scalar_select %p406, %s405, 3
        %s408 = smul.addr %s407, 2
        %s409 = smul.addr %s408, 8
        %s410 = scalar_lea.vmem %s6, %s409
      $region56: #{patchtst_embed_pe.1} parent=51 // pred_fallthru
        _
    $region52: #{patchtst_embed_pe.1} parent=5 // pred_fallthru
      _
  $region6: #{patchtst_embed_pe.1} parent=0 // loop_footer
    %s16 = sadd.s32 1, %s12
  $region7: #{patchtst_embed_pe.1} parent=0 // loop_footer_branch
    %11 = sbr.rel target = $region3
  $region8: #{patchtst_embed_pe.1} parent=0 // loop_exit
    _

// kernel: tile.7
$region0: #{tile.7}
  %s0 = inlined_call_operand.vmem [shape: f32[4,4,256], index: 0, kind: input, shape index: {}]
  %s1 = inlined_call_operand.vmem [shape: f32[16,256], index: 1, kind: output, shape index: {}]
  $region1: #{tile.7} parent=0
    #allocation0 [shape = 'u8[32768]{0}', space=vmem, size = 0x8000, scoped, tag = 'scoped mem for input reshape']
    %s3 = ssub.s32 16, 1
    %s4 = scalar_lea.vmem %s0, 28
    %v5 = vld [vmem:[%s4] sm:%s3]
    %s6 = scalar_lea.vmem [#allocation0], 56
    %7 = vst [vmem:[%s6] sm:%s3] %v5
    %s8 = scalar_lea.vmem %s0, 24
    %v9 = vld [vmem:[%s8] sm:%s3]
    %s10 = scalar_lea.vmem [#allocation0], 48
    %11 = vst [vmem:[%s10] sm:%s3] %v9
    %s12 = scalar_lea.vmem %s0, 20
    %v13 = vld [vmem:[%s12] sm:%s3]
    %s14 = scalar_lea.vmem [#allocation0], 40
    %15 = vst [vmem:[%s14] sm:%s3] %v13
    %s16 = scalar_lea.vmem %s0, 16
    %v17 = vld [vmem:[%s16] sm:%s3]
    %s18 = scalar_lea.vmem [#allocation0], 32
    %19 = vst [vmem:[%s18] sm:%s3] %v17
    %s20 = scalar_lea.vmem %s0, 12
    %v21 = vld [vmem:[%s20] sm:%s3]
    %s22 = scalar_lea.vmem [#allocation0], 24
    %23 = vst [vmem:[%s22] sm:%s3] %v21
    %s24 = scalar_lea.vmem %s0, 8
    %v25 = vld [vmem:[%s24] sm:%s3]
    %s26 = scalar_lea.vmem [#allocation0], 16
    %27 = vst [vmem:[%s26] sm:%s3] %v25
    %s28 = scalar_lea.vmem %s0, 4
    %v29 = vld [vmem:[%s28] sm:%s3]
    %s30 = scalar_lea.vmem [#allocation0], 8
    %31 = vst [vmem:[%s30] sm:%s3] %v29
    %v32 = vld [vmem:[%s0] sm:%s3]
    %33 = vst [vmem:[#allocation0] sm:%s3] %v32
    %v34 = vld [vmem:[#allocation0] sm:$0xf]
    %35 = vst [vmem:[%s1] sm:$0xf] %v34
    %s36 = scalar_lea.vmem [#allocation0], 8
    %v37 = vld [vmem:[%s36] sm:$0xf]
    %s38 = scalar_lea.vmem %s1, 8
    %39 = vst [vmem:[%s38] sm:$0xf] %v37
    %s40 = scalar_lea.vmem [#allocation0], 16
    %v41 = vld [vmem:[%s40] sm:$0xf]
    %s42 = scalar_lea.vmem %s1, 4
    %43 = vst [vmem:[%s42] sm:$0xf] %v41
    %s44 = scalar_lea.vmem [#allocation0], 24
    %v45 = vld [vmem:[%s44] sm:$0xf]
    %s46 = scalar_lea.vmem %s1, 12
    %47 = vst [vmem:[%s46] sm:$0xf] %v45
    %s48 = scalar_lea.vmem [#allocation0], 32
    %v49 = vld [vmem:[%s48] sm:$0xf]
    %s50 = scalar_lea.vmem %s1, 16
    %51 = vst [vmem:[%s50] sm:$0xf] %v49
    %s52 = scalar_lea.vmem [#allocation0], 40
    %v53 = vld [vmem:[%s52] sm:$0xf]
    %s54 = scalar_lea.vmem %s1, 24
    %55 = vst [vmem:[%s54] sm:$0xf] %v53
    %s56 = scalar_lea.vmem [#allocation0], 48
    %v57 = vld [vmem:[%s56] sm:$0xf]
    %s58 = scalar_lea.vmem %s1, 20
    %59 = vst [vmem:[%s58] sm:$0xf] %v57
    %s60 = scalar_lea.vmem [#allocation0], 56
    %v61 = vld [vmem:[%s60] sm:$0xf]
    %s62 = scalar_lea.vmem %s1, 28
    %63 = vst [vmem:[%s62] sm:$0xf] %v61

// kernel: patchtst_embed_pe.1
$region0: #{patchtst_embed_pe.1}
  #allocation0 [shape = 'u32[]', space=smem, size = 0x4, offset = 0x4, fixed_abs, tag = 'smem constant byte address 0x4 - core index']
  #allocation1 [shape = 'u32[72,128]{1,0:T(1,128)}', space=vmem, size = 0x9000, scoped, tag = 'internal scratch']
  %s0 = inlined_call_operand.vmem [shape: f32[32,8], index: 0, kind: input, shape index: {}]
  %s1 = inlined_call_operand.vmem [shape: f32[8,64], index: 1, kind: input, shape index: {}]
  %s2 = inlined_call_operand.vmem [shape: f32[1,64], index: 2, kind: input, shape index: {}]
  %s3 = inlined_call_operand.vmem [shape: f32[64,256], index: 3, kind: input, shape index: {}]
  %s4 = inlined_call_operand.vmem [shape: f32[1,256], index: 4, kind: input, shape index: {}]
  %s5 = inlined_call_operand.vmem [shape: f32[16,256], index: 5, kind: input, shape index: {}]
  %s6 = inlined_call_operand.vmem [shape: f32[32,256], index: 6, kind: output, shape index: {}]
  %s7 = sld [smem:[#allocation0]]
  $region57: #{patchtst_embed_pe.1} parent=0
    _
  %s9 = ssub.s32 1, %s7
  %s10 = scalar_select 0, %s9, %s7
  loop: start=0, step=1, limit=4
  $region2: #{patchtst_embed_pe.1} parent=0 // loop_pre_header
    _
  $region3: #{patchtst_embed_pe.1} parent=0 // loop_header
    %s12 = sphi 0, %s16
    %p13 = scmp.ge.s32.totalorder %s12, 4
    %s22 = sphi 0, %s24
    %s25 = sphi 0, %s22
    %s26 = sphi 0, %s25
    %s42 = sphi 0, %s26
    %s46 = sphi 0, %s46
    %s48 = sphi 0, %s46
    %s49 = sphi 0, %s48
    %s63 = sphi 0, %s49
    %s67 = sphi 0, %s67
    %s69 = sphi 0, %s67
    %s70 = sphi 0, %s69
    %s84 = sphi 0, %s70
    %s88 = sphi 0, %s88
    %s90 = sphi 0, %s88
    %s91 = sphi 0, %s90
    %s105 = sphi 0, %s91
    %s109 = sphi 0, %s109
    %s111 = sphi 0, %s109
    %s112 = sphi 0, %s111
    %s126 = sphi 0, %s112
    %s130 = sphi 0, %s130
    %s132 = sphi 0, %s130
    %s133 = sphi 0, %s132
    %s147 = sphi 0, %s133
    %s153 = sphi 0, %s155
    %s156 = sphi 0, %s153
    %s157 = sphi 0, %s156
    %s173 = sphi 0, %s157
  $region4: #{patchtst_embed_pe.1} parent=0 // loop_header_branch
    %15 = sbr.rel (%p13) target = $region8
  $region5: #{patchtst_embed_pe.1} parent=0 // loop_body
    %s17 = ssub.s32 %s12, 1
    %s18 = ssub.s32 %s12, 2
    %s19 = sadd.s32 %s12, 1
    %s20 = ssub.s32 %s12, %s19
    %p21 = scmp.eq.s32.totalorder %s20, 0
    %s23 = sadd.s32 %s22, 1
    %s24 = scalar_select %p21, %s22, %s23
    %p27 = pneg %p21
    %p28 = scmp.eq.s32.totalorder %s12, 1
    %p29 = por %p27, %p28
    %p30 = scmp.ne.s32.totalorder %s22, %s25
    %p31 = scmp.eq.s32.totalorder %s12, 0
    %p32 = por %p30, %p31
    %p33 = scmp.ne.s32.totalorder %s22, %s25
    %p34 = scmp.eq.s32.totalorder %s17, 1
    %p35 = por %p33, %p34
    %p36 = scmp.ne.s32.totalorder %s25, %s26
    %p37 = scmp.eq.s32.totalorder %s17, 0
    %p38 = por %p36, %p37
    %p39 = scmp.ne.s32.totalorder %s25, %s26
    %p40 = scmp.eq.s32.totalorder %s18, 1
    %p41 = por %p39, %p40
    %p43 = scmp.ne.s32.totalorder %s26, %s42
    %p44 = scmp.eq.s32.totalorder %s18, 0
    %p45 = por %p43, %p44
    %s47 = sadd.s32 %s46, 1
    %p50 = scmp.eq.s32.totalorder %s12, 1
    %p51 = scmp.ne.s32.totalorder %s46, %s48
    %p52 = scmp.eq.s32.totalorder %s12, 0
    %p53 = por %p51, %p52
    %p54 = scmp.ne.s32.totalorder %s46, %s48
    %p55 = scmp.eq.s32.totalorder %s17, 1
    %p56 = por %p54, %p55
    %p57 = scmp.ne.s32.totalorder %s48, %s49
    %p58 = scmp.eq.s32.totalorder %s17, 0
    %p59 = por %p57, %p58
    %p60 = scmp.ne.s32.totalorder %s48, %s49
    %p61 = scmp.eq.s32.totalorder %s18, 1
    %p62 = por %p60, %p61
    %p64 = scmp.ne.s32.totalorder %s49, %s63
    %p65 = scmp.eq.s32.totalorder %s18, 0
    %p66 = por %p64, %p65
    %s68 = sadd.s32 %s67, 1
    %p71 = scmp.eq.s32.totalorder %s12, 1
    %p72 = scmp.ne.s32.totalorder %s67, %s69
    %p73 = scmp.eq.s32.totalorder %s12, 0
    %p74 = por %p72, %p73
    %p75 = scmp.ne.s32.totalorder %s67, %s69
    %p76 = scmp.eq.s32.totalorder %s17, 1
    %p77 = por %p75, %p76
    %p78 = scmp.ne.s32.totalorder %s69, %s70
    %p79 = scmp.eq.s32.totalorder %s17, 0
    %p80 = por %p78, %p79
    %p81 = scmp.ne.s32.totalorder %s69, %s70
    %p82 = scmp.eq.s32.totalorder %s18, 1
    %p83 = por %p81, %p82
    %p85 = scmp.ne.s32.totalorder %s70, %s84
    %p86 = scmp.eq.s32.totalorder %s18, 0
    %p87 = por %p85, %p86
    %s89 = sadd.s32 %s88, 1
    %p92 = scmp.eq.s32.totalorder %s12, 1
    %p93 = scmp.ne.s32.totalorder %s88, %s90
    %p94 = scmp.eq.s32.totalorder %s12, 0
    %p95 = por %p93, %p94
    %p96 = scmp.ne.s32.totalorder %s88, %s90
    %p97 = scmp.eq.s32.totalorder %s17, 1
    %p98 = por %p96, %p97
    %p99 = scmp.ne.s32.totalorder %s90, %s91
    %p100 = scmp.eq.s32.totalorder %s17, 0
    %p101 = por %p99, %p100
    %p102 = scmp.ne.s32.totalorder %s90, %s91
    %p103 = scmp.eq.s32.totalorder %s18, 1
    %p104 = por %p102, %p103
    %p106 = scmp.ne.s32.totalorder %s91, %s105
    %p107 = scmp.eq.s32.totalorder %s18, 0
    %p108 = por %p106, %p107
    %s110 = sadd.s32 %s109, 1
    %p113 = scmp.eq.s32.totalorder %s12, 1
    %p114 = scmp.ne.s32.totalorder %s109, %s111
    %p115 = scmp.eq.s32.totalorder %s12, 0
    %p116 = por %p114, %p115
    %p117 = scmp.ne.s32.totalorder %s109, %s111
    %p118 = scmp.eq.s32.totalorder %s17, 1
    %p119 = por %p117, %p118
    %p120 = scmp.ne.s32.totalorder %s111, %s112
    %p121 = scmp.eq.s32.totalorder %s17, 0
    %p122 = por %p120, %p121
    %p123 = scmp.ne.s32.totalorder %s111, %s112
    %p124 = scmp.eq.s32.totalorder %s18, 1
    %p125 = por %p123, %p124
    %p127 = scmp.ne.s32.totalorder %s112, %s126
    %p128 = scmp.eq.s32.totalorder %s18, 0
    %p129 = por %p127, %p128
    %s131 = sadd.s32 %s130, 1
    %p134 = scmp.eq.s32.totalorder %s12, 1
    %p135 = scmp.ne.s32.totalorder %s130, %s132
    %p136 = scmp.eq.s32.totalorder %s12, 0
    %p137 = por %p135, %p136
    %p138 = scmp.ne.s32.totalorder %s130, %s132
    %p139 = scmp.eq.s32.totalorder %s17, 1
    %p140 = por %p138, %p139
    %p141 = scmp.ne.s32.totalorder %s132, %s133
    %p142 = scmp.eq.s32.totalorder %s17, 0
    %p143 = por %p141, %p142
    %p144 = scmp.ne.s32.totalorder %s132, %s133
    %p145 = scmp.eq.s32.totalorder %s18, 1
    %p146 = por %p144, %p145
    %p148 = scmp.ne.s32.totalorder %s133, %s147
    %p149 = scmp.eq.s32.totalorder %s18, 0
    %p150 = por %p148, %p149
    %s151 = ssub.s32 %s12, %s19
    %p152 = scmp.eq.s32.totalorder %s151, 0
    %s154 = sadd.s32 %s153, 1
    %s155 = scalar_select %p152, %s153, %s154
    %p158 = pneg %p152
    %p159 = scmp.eq.s32.totalorder %s12, 1
    %p160 = por %p158, %p159
    %p161 = scmp.ne.s32.totalorder %s153, %s156
    %p162 = scmp.eq.s32.totalorder %s12, 0
    %p163 = por %p161, %p162
    %p164 = scmp.ne.s32.totalorder %s153, %s156
    %p165 = scmp.eq.s32.totalorder %s17, 1
    %p166 = por %p164, %p165
    %p167 = scmp.ne.s32.totalorder %s156, %s157
    %p168 = scmp.eq.s32.totalorder %s17, 0
    %p169 = por %p167, %p168
    %p170 = scmp.ne.s32.totalorder %s156, %s157
    %p171 = scmp.eq.s32.totalorder %s18, 1
    %p172 = por %p170, %p171
    %p174 = scmp.ne.s32.totalorder %s157, %s173
    %p175 = scmp.eq.s32.totalorder %s18, 0
    %p176 = por %p174, %p175
    %p177 = scmp.le.s32.totalorder 1, %s12
    %p178 = scmp.lt.s32.totalorder %s12, 3
    %p179 = pnand %p177, %p178
    %p180 = pneg %p179
    // Predicated region
    $region9: #{patchtst_embed_pe.1} parent=5 // pred_check
      _
    $region10: #{patchtst_embed_pe.1} parent=5 // pred_check_branch
      %182 = sbr.rel (%p179) target = $region12
    $region11: #{patchtst_embed_pe.1} parent=5 // pred_region
      %s183 = ssub.s32 %s12, 1
      // Predicated region
      $region13: #{patchtst_embed_pe.1} parent=11 // pred_check
        %p184 = pneg %p59
      $region14: #{patchtst_embed_pe.1} parent=11 // pred_check_branch
        %186 = sbr.rel (%p184) target = $region16
      $region15: #{patchtst_embed_pe.1} parent=11 // pred_region
        _
      $region16: #{patchtst_embed_pe.1} parent=11 // pred_fallthru
        _
      // Predicated region
      $region17: #{patchtst_embed_pe.1} parent=11 // pred_check
        %p187 = pneg %p80
      $region18: #{patchtst_embed_pe.1} parent=11 // pred_check_branch
        %189 = sbr.rel (%p187) target = $region20
      $region19: #{patchtst_embed_pe.1} parent=11 // pred_region
        _
      $region20: #{patchtst_embed_pe.1} parent=11 // pred_fallthru
        _
      // Predicated region
      $region21: #{patchtst_embed_pe.1} parent=11 // pred_check
        %p190 = pneg %p101
      $region22: #{patchtst_embed_pe.1} parent=11 // pred_check_branch
        %192 = sbr.rel (%p190) target = $region24
      $region23: #{patchtst_embed_pe.1} parent=11 // pred_region
        _
      $region24: #{patchtst_embed_pe.1} parent=11 // pred_fallthru
        _
      // Predicated region
      $region25: #{patchtst_embed_pe.1} parent=11 // pred_check
        %p193 = pneg %p122
      $region26: #{patchtst_embed_pe.1} parent=11 // pred_check_branch
        %195 = sbr.rel (%p193) target = $region28
      $region27: #{patchtst_embed_pe.1} parent=11 // pred_region
        _
      $region28: #{patchtst_embed_pe.1} parent=11 // pred_fallthru
        _
      // Predicated region
      $region29: #{patchtst_embed_pe.1} parent=11 // pred_check
        %p196 = pneg %p143
      $region30: #{patchtst_embed_pe.1} parent=11 // pred_check_branch
        %198 = sbr.rel (%p196) target = $region32
      $region31: #{patchtst_embed_pe.1} parent=11 // pred_region
        _
      $region32: #{patchtst_embed_pe.1} parent=11 // pred_fallthru
        _
    $region12: #{patchtst_embed_pe.1} parent=5 // pred_fallthru
      _
    %p199 = scmp.lt.s32.totalorder %s12, 2
    // Predicated region
    $region33: #{patchtst_embed_pe.1} parent=5 // pred_check
      %p200 = pneg %p199
    $region34: #{patchtst_embed_pe.1} parent=5 // pred_check_branch
      %202 = sbr.rel (%p200) target = $region36
    $region35: #{patchtst_embed_pe.1} parent=5 // pred_region
      // Predicated region
      $region37: #{patchtst_embed_pe.1} parent=35 // pred_check
        %p203 = pneg %p32
      $region38: #{patchtst_embed_pe.1} parent=35 // pred_check_branch
        %205 = sbr.rel (%p203) target = $region40
      $region39: #{patchtst_embed_pe.1} parent=35 // pred_region
        %s206 = smul.u32 2, %s12
        %p207 = scmp.lt.s32.totalorder %s206, 3
        %s208 = scalar_select %p207, %s206, 3
        %s209 = smul.addr %s208, 8
        %s210 = scalar_lea.vmem %s0, %s209
        %s211 = smul.u32 2, %s12
      $region40: #{patchtst_embed_pe.1} parent=35 // pred_fallthru
        _
    $region36: #{patchtst_embed_pe.1} parent=5 // pred_fallthru
      _
    %p212 = scmp.le.s32.totalorder 1, %s12
    %p213 = scmp.lt.s32.totalorder %s12, 3
    %p214 = pnand %p212, %p213
    %p215 = pneg %p214
    // Predicated region
    $region41: #{patchtst_embed_pe.1} parent=5 // pred_check
      _
    $region42: #{patchtst_embed_pe.1} parent=5 // pred_check_branch
      %217 = sbr.rel (%p214) target = $region44
    $region43: #{patchtst_embed_pe.1} parent=5 // pred_region
      %s218 = ssub.s32 %s12, 1
      %s219 = smul.u32 2, %s17
      %p220 = scmp.lt.s32.totalorder %s219, 3
      %s221 = scalar_select %p220, %s219, 3
      %s222 = smul.addr %s221, 8
      %s223 = scalar_lea.vmem %s0, %s222
      %p224 = pneg %p38
      %p225 = pneg %p35
      %p226 = pneg %p59
      %p227 = pneg %p56
      %p228 = pneg %p80
      %p229 = pneg %p77
      %p230 = pneg %p101
      %p231 = pneg %p98
      %p232 = pneg %p122
      %p233 = pneg %p119
      %p234 = pneg %p143
      %p235 = pneg %p140
      %p236 = pneg %p169
      %p237 = pneg %p166
      %s238 = smul.u32 2, %s17
      %p239 = scmp.lt.s32.totalorder %s238, 3
      %s240 = scalar_select %p239, %s238, 3
      %s241 = smul.addr %s240, 2
      %s242 = smul.addr %s241, 8
      %s243 = scalar_lea.vmem %s6, %s242
      %s244 = smul.u32 2, %s17
      %p245 = scmp.lt.s32.totalorder %s244, 3
      %s246 = scalar_select %p245, %s244, 3
      %s247 = smul.addr %s246, 8
      %s248 = scalar_lea.vmem %s0, %s247
      %s249 = smul.u32 2, %s17
      %s250 = smul.u32 2, %s17
      %p251 = scmp.lt.s32.totalorder %s250, 3
      %s252 = scalar_select %p251, %s250, 3
      %s253 = smul.addr %s252, 2
      %s254 = smul.addr %s253, 8
      %s255 = scalar_lea.vmem %s6, %s254
      %s256 = smul.u32 2, %s17
      %v257 = vld [vmem:[%s248] sm:$0xff]
      %v258 = vld [vmem:[%s248 + $0x8] sm:$0xff]
      %v259 = vld [vmem:[%s1] sm:$0xff]
      %v260 = vld [vmem:[%s2] sm:$0x1]
      %v262 = vperm.slane %v260, 0
      %vm264 = vcmask 64512
      %v266 = vsel %vm264, %v257, 0
      %v269 = vsel %vm264, %v258, 0
      %271 = vmatpush.msra.mxu0 0.0
      %272 = vmatpush.msra.mxu0 0.0
      %273 = vmatpush.msra.mxu0 0.0
      %274 = vmatpush.msra.mxu0 0.0
      %275 = vmatpush.msra.mxu0 0.0
      %276 = vmatpush.msra.mxu0 0.0
      %277 = vmatpush.msra.mxu0 0.0
      %278 = vmatpush.msra.mxu0 0.0
      %279 = vmatpush.msra.mxu0 0.0
      %280 = vmatpush.msra.mxu0 0.0
      %281 = vmatpush.msra.mxu0 0.0
      %282 = vmatpush.msra.mxu0 0.0
      %283 = vmatpush.msra.mxu0 0.0
      %284 = vmatpush.msra.mxu0 0.0
      %285 = vmatpush.msra.mxu0 0.0
      %286 = vmatpush.msra.mxu0 %v259
      %287 = vmatmul.f32.gmra.mxu0 %v266
      %v288 = vpop.f32.mrf.mxu0
      %v289 = vadd.f32 %v262, %v288
      %290 = vmatmul.f32.gmra.mxu0 %v269
      %v291 = vpop.f32.mrf.mxu0
      %v292 = vadd.f32 %v262, %v291
      %293 = vdwg.mxu0
      %v294 = vmax.f32 %v289, 0.0
      %v295 = vmax.f32 %v292, 0.0
      %v296 = vld [vmem:[%s3] sm:$0xff]
      %v297 = vld [vmem:[%s3 + $0x8] sm:$0xff]
      %v298 = vld [vmem:[%s3 + $0x10] sm:$0xff]
      %v299 = vld [vmem:[%s3 + $0x18] sm:$0xff]
      %v300 = vld [vmem:[%s3 + $0x20] sm:$0xff]
      %v301 = vld [vmem:[%s3 + $0x28] sm:$0xff]
      %v302 = vld [vmem:[%s3 + $0x30] sm:$0xff]
      %v303 = vld [vmem:[%s3 + $0x38] sm:$0xff]
      %v304 = vld [vmem:[%s3 + $0x40] sm:$0xff]
      %v305 = vld [vmem:[%s3 + $0x48] sm:$0xff]
      %v306 = vld [vmem:[%s3 + $0x50] sm:$0xff]
      %v307 = vld [vmem:[%s3 + $0x58] sm:$0xff]
      %v308 = vld [vmem:[%s3 + $0x60] sm:$0xff]
      %v309 = vld [vmem:[%s3 + $0x68] sm:$0xff]
      %v310 = vld [vmem:[%s3 + $0x70] sm:$0xff]
      %v311 = vld [vmem:[%s3 + $0x78] sm:$0xff]
      %v312 = vld [vmem:[%s4] sm:$0x3]
      %v314 = vperm.slane %v312, 0
      %v315 = vperm.slane %v312, 1
      %vm318 = vcmask 523264
      %v320 = vsel %vm318, %v294, 0
      %v323 = vsel %vm318, %v295, 0
      %325 = vmatpush.msra.mxu0 0.0
      %326 = vmatpush.msra.mxu0 0.0
      %327 = vmatpush.msra.mxu0 0.0
      %328 = vmatpush.msra.mxu0 0.0
      %329 = vmatpush.msra.mxu0 0.0
      %330 = vmatpush.msra.mxu0 0.0
      %331 = vmatpush.msra.mxu0 0.0
      %332 = vmatpush.msra.mxu0 0.0
      %333 = vmatpush.msra.mxu0 %v310
      %334 = vmatpush.msra.mxu0 %v308
      %335 = vmatpush.msra.mxu0 %v306
      %336 = vmatpush.msra.mxu0 %v304
      %337 = vmatpush.msra.mxu0 %v302
      %338 = vmatpush.msra.mxu0 %v300
      %339 = vmatpush.msra.mxu0 %v298
      %340 = vmatpush.msra.mxu0 %v296
      %341 = vmatmul.f32.gmra.mxu0 %v320
      %v342 = vpop.f32.mrf.mxu0
      %v343 = vadd.f32 %v314, %v342
      %344 = vmatmul.f32.gmra.mxu0 %v323
      %v345 = vpop.f32.mrf.mxu0
      %v346 = vadd.f32 %v314, %v345
      %347 = vdwg.mxu0
      %348 = vmatpush.msra.mxu0 0.0
      %349 = vmatpush.msra.mxu0 0.0
      %350 = vmatpush.msra.mxu0 0.0
      %351 = vmatpush.msra.mxu0 0.0
      %352 = vmatpush.msra.mxu0 0.0
      %353 = vmatpush.msra.mxu0 0.0
      %354 = vmatpush.msra.mxu0 0.0
      %355 = vmatpush.msra.mxu0 0.0
      %356 = vmatpush.msra.mxu0 %v311
      %357 = vmatpush.msra.mxu0 %v309
      %358 = vmatpush.msra.mxu0 %v307
      %359 = vmatpush.msra.mxu0 %v305
      %360 = vmatpush.msra.mxu0 %v303
      %361 = vmatpush.msra.mxu0 %v301
      %362 = vmatpush.msra.mxu0 %v299
      %363 = vmatpush.msra.mxu0 %v297
      %364 = vmatmul.f32.gmra.mxu0 %v320
      %v365 = vpop.f32.mrf.mxu0
      %v366 = vadd.f32 %v315, %v365
      %367 = vmatmul.f32.gmra.mxu0 %v323
      %v368 = vpop.f32.mrf.mxu0
      %v369 = vadd.f32 %v315, %v368
      %370 = vdwg.mxu0
      %v371 = vmax.f32 %v343, 0.0
      %v372 = vmax.f32 %v366, 0.0
      %v373 = vmax.f32 %v346, 0.0
      %v374 = vmax.f32 %v369, 0.0
      %v375 = vld [vmem:[%s5] sm:$0xff]
      %v376 = vld [vmem:[%s5 + $0x8] sm:$0xff]
      %v377 = vld [vmem:[%s5 + $0x10] sm:$0xff]
      %v378 = vld [vmem:[%s5 + $0x18] sm:$0xff]
      %v379 = vadd.f32 %v371, %v375
      %v380 = vadd.f32 %v372, %v376
      %v381 = vadd.f32 %v373, %v377
      %v382 = vadd.f32 %v374, %v378
      %383 = vst [vmem:[%s255] sm:$0xff] %v379
      %384 = vst [vmem:[%s255 + $0x8] sm:$0xff] %v380
      %385 = vst [vmem:[%s255 + $0x10] sm:$0xff] %v381
      %386 = vst [vmem:[%s255 + $0x18] sm:$0xff] %v382
      %s387 = smul.u32 2, %s17
      %p388 = scmp.lt.s32.totalorder %s387, 3
      %s389 = scalar_select %p388, %s387, 3
      %s390 = smul.addr %s389, 2
      %s391 = smul.addr %s390, 8
      %s392 = scalar_lea.vmem %s6, %s391
      // Predicated region
      $region45: #{patchtst_embed_pe.1} parent=43 // pred_check
        %p393 = pneg %p166
      $region46: #{patchtst_embed_pe.1} parent=43 // pred_check_branch
        %395 = sbr.rel (%p393) target = $region48
      $region47: #{patchtst_embed_pe.1} parent=43 // pred_region
        %s396 = smul.u32 2, %s17
      $region48: #{patchtst_embed_pe.1} parent=43 // pred_fallthru
        _
    $region44: #{patchtst_embed_pe.1} parent=5 // pred_fallthru
      _
    %p397 = scmp.le.s32.totalorder 2, %s12
    // Predicated region
    $region49: #{patchtst_embed_pe.1} parent=5 // pred_check
      %p398 = pneg %p397
    $region50: #{patchtst_embed_pe.1} parent=5 // pred_check_branch
      %400 = sbr.rel (%p398) target = $region52
    $region51: #{patchtst_embed_pe.1} parent=5 // pred_region
      %s401 = ssub.s32 %s12, 2
      // Predicated region
      $region53: #{patchtst_embed_pe.1} parent=51 // pred_check
        %p402 = pneg %p172
      $region54: #{patchtst_embed_pe.1} parent=51 // pred_check_branch
        %404 = sbr.rel (%p402) target = $region56
      $region55: #{patchtst_embed_pe.1} parent=51 // pred_region
        %s405 = smul.u32 2, %s18
        %p406 = scmp.lt.s32.totalorder %s405, 3
        %s407 = scalar_select %p406, %s405, 3
        %s408 = smul.addr %s407, 2
        %s409 = smul.addr %s408, 8
        %s410 = scalar_lea.vmem %s6, %s409
      $region56: #{patchtst_embed_pe.1} parent=51 // pred_fallthru
        _
    $region52: #{patchtst_embed_pe.1} parent=5 // pred_fallthru
      _
  $region6: #{patchtst_embed_pe.1} parent=0 // loop_footer
    %s16 = sadd.s32 1, %s12
  $region7: #{patchtst_embed_pe.1} parent=0 // loop_footer_branch
    %11 = sbr.rel target = $region3
  $region8: #{patchtst_embed_pe.1} parent=0 // loop_exit
    _

</llo_original>
